<compile_context>
chip_gen: v6e
topology: v6e:2x2x1
jax: 0.10.0
libtpu: 0.0.40
codegen_flags: <defaults>
</compile_context>

<pallas_src>
import functools
import math

import jax
import jax.numpy as jnp
from jax import lax
from jax.experimental import pallas as pl
from jax.experimental.pallas import tpu as pltpu

_LANE = 128
_SUBLANE = 8
_TARGET_OUT_TILE_BYTES = 1 << 20     # ~1 MiB output tiles amortize per-step overhead
_MAX_ROWS_VMEM = 2048                # max rows gathered per step, VMEM fast path
_MAX_ROWS_DMA = 512                  # max rows gathered per step, HBM DMA path
_DMA_WINDOW = 32                     # in-flight row DMAs on the HBM path
_MAX_SAMPLES_PER_CALL = 64 * 1024    # keeps the SMEM scalar-prefetch array <= 256 KiB


def _round_up(x: int, n: int) -> int:
    return -(-x // n) * n


def _vmem_budgets():
    """Per-generation VMEM limits: (vmem_limit_bytes, resident-table budget)."""
    cap = 64 << 20                                   # conservative fallback (v7x-sized)
    try:
        info = pltpu.get_tpu_info()
        cap = int(getattr(info, "vmem_capacity_bytes", cap)) or cap
    except Exception:
        pass
    limit = max(32 << 20, min(cap - (8 << 20), int(cap * 0.85)))
    # Table is double-buffered by the pipeline (constant block index or not), so
    # budget = (limit - double-buffered output tiles - slack) / 2.
    table_budget = max(8 << 20, (limit - 4 * _TARGET_OUT_TILE_BYTES - (4 << 20)) // 2)
    return limit, table_budget


def _pick_rows_per_step(num_samples: int, row_vmem_bytes: int,
                        max_rows: int, row_multiple: int) -> int:
    """Rows per grid step: a power-of-two multiple of row_multiple, capped by
    max_rows, a ~1 MiB output tile, and (when possible) >= 2 grid steps so the
    'parallel' sample axis can shard across both v7x TensorCores."""
    cap_rows = _round_up(max(num_samples, 1), row_multiple)
    if cap_rows > row_multiple:
        cap_rows = _round_up(-(-num_samples // 2), row_multiple)   # >= 2 steps
    t = row_multiple
    while (t * 2 <= max_rows
           and t * 2 * row_vmem_bytes <= _TARGET_OUT_TILE_BYTES
           and t * 2 <= cap_rows):
        t *= 2
    return t


# ---------------------------------------------------------------------------
# Kernels
# ---------------------------------------------------------------------------

def _vmem_gather_kernel(idx_ref, data_ref, out_ref):
    """Fast path: whole (R, S) table resident in VMEM; copy T rows per step."""
    t_rows = out_ref.shape[0]
    base = pl.program_id(0) * t_rows

    def body(t, carry):
        row = idx_ref[base + t]                                   # SMEM scalar read
        out_ref[pl.ds(t, 1), :] = data_ref[pl.ds(row, 1), :]      # 1-row VMEM copy
        return carry

    # Unrolling lets the scheduler interleave independent row copies (hides the
    # SMEM load-use and vld->vst latency behind neighbouring rows).
    lax.fori_loop(0, t_rows, body, 0, unroll=min(t_rows, 16))


def _dma_gather_kernel(idx_ref, data_hbm, out_ref, sems, *, n_win):
    """Large-table path: gather rows straight from HBM into the output block.

    A rolling window of n_win row DMAs is kept in flight; there is no VMEM
    staging buffer — the pipelined output writeback reads whatever the DMAs
    deposited in the block."""
    t_rows = out_ref.shape[0]
    base = pl.program_id(0) * t_rows

    def start_row(t, row):
        pltpu.make_async_copy(
            data_hbm.at[pl.ds(row, 1), :],
            out_ref.at[pl.ds(t, 1), :],
            sems.at[t & (n_win - 1)],
        ).start()

    def wait_slot(slot):
        # The descriptor only needs a matching transfer shape for the wait.
        pltpu.make_async_copy(
            data_hbm.at[pl.ds(0, 1), :],
            out_ref.at[pl.ds(0, 1), :],
            sems.at[slot],
        ).wait()

    # Fill the in-flight window.
    def prime(t, c):
        start_row(t, idx_ref[base + t])
        return c
    lax.fori_loop(0, n_win, prime, 0, unroll=True)

    # Steady state: recycle the oldest slot, then issue the next row.
    def steady(t, c):
        row = idx_ref[base + t]          # scalar read before the sem wait
        wait_slot(t & (n_win - 1))
        start_row(t, row)
        return c
    lax.fori_loop(n_win, t_rows, steady, 0)

    # Drain the remaining in-flight DMAs.
    def drain(s, c):
        wait_slot(s)
        return c
    lax.fori_loop(0, n_win, drain, 0, unroll=True)


# ---------------------------------------------------------------------------
# Wrapper
# ---------------------------------------------------------------------------

def _pack_rows_to_u32(x2d, pack):
    """Pack `pack` consecutive sub-32-bit elements of each row into one uint32."""
    bits = 32 // pack
    u = lax.bitcast_convert_type(x2d, jnp.dtype(f"uint{bits}"))      # same width
    u = u.reshape(x2d.shape[0], x2d.shape[1] // pack, pack).astype(jnp.uint32)
    out = u[..., 0]
    for p in range(1, pack):
        out = out | (u[..., p] << (p * bits))
    return out


def _unpack_rows_from_u32(y2d, pack, dtype):
    bits = 32 // pack
    mask = jnp.uint32((1 << bits) - 1)
    parts = [((y2d >> (p * bits)) & mask).astype(jnp.dtype(f"uint{bits}"))
             for p in range(pack)]
    u = jnp.stack(parts, axis=-1)                                    # (n, S_g, pack)
    x = lax.bitcast_convert_type(u, dtype)                           # same width
    return x.reshape(y2d.shape[0], y2d.shape[1] * pack)


def _gather_rows(data2d, flat_idx, row_multiple, max_table_bytes_override):
    """Gather rows of a 2-D table by flat index via Pallas; returns (n, S) rows."""
    R, S_g = data2d.shape
    n = int(flat_idx.shape[0])
    itemsize = jnp.dtype(data2d.dtype).itemsize
    row_vmem_bytes = _round_up(S_g, _LANE) * itemsize        # includes lane padding

    vmem_limit, table_budget = _vmem_budgets()
    if max_table_bytes_override is not None:
        table_budget = max_table_bytes_override
    table_vmem_bytes = _round_up(R, _SUBLANE) * row_vmem_bytes
    use_vmem_path = table_vmem_bytes <= table_budget

    max_rows = _MAX_ROWS_VMEM if use_vmem_path else _MAX_ROWS_DMA
    rows_per_step = _pick_rows_per_step(n, row_vmem_bytes, max_rows, row_multiple)
    num_steps = pl.cdiv(n, rows_per_step)
    padded = num_steps * rows_per_step
    if padded != n:
        # Padding index 0 is always a valid (clamped) row; padded rows are sliced off.
        flat_idx = jnp.pad(flat_idx, (0, padded - n))

    out_bytes = padded * S_g * itemsize
    table_bytes = R * S_g * itemsize
    cost = pl.CostEstimate(
        flops=0, transcendentals=0,
        # output write + writeback read + gathered HBM/VMEM table read
        bytes_accessed=2 * out_bytes + (table_bytes if use_vmem_path else out_bytes))

    compiler_params = pltpu.CompilerParams(
        dimension_semantics=("parallel",),      # sample axis shards across TCs (v7x)
        vmem_limit_bytes=int(vmem_limit),
    )

    if use_vmem_path:
        out2d = pl.pallas_call(
            _vmem_gather_kernel,
            out_shape=jax.ShapeDtypeStruct((padded, S_g), data2d.dtype),
            grid_spec=pltpu.PrefetchScalarGridSpec(
                num_scalar_prefetch=1,
                grid=(num_steps,),
                in_specs=[
                    # Whole table as a single full-extent VMEM block (constant index).
                    pl.BlockSpec((R, S_g), lambda i, idx_ref: (0, 0)),
                ],
                out_specs=pl.BlockSpec((rows_per_step, S_g),
                                       lambda i, idx_ref: (i, 0)),
            ),
            compiler_params=compiler_params,
            cost_estimate=cost,
        )(flat_idx, data2d)
    else:
        n_win = min(_DMA_WINDOW, rows_per_step)
        out2d = pl.pallas_call(
            functools.partial(_dma_gather_kernel, n_win=n_win),
            out_shape=jax.ShapeDtypeStruct((padded, S_g), data2d.dtype),
            grid_spec=pltpu.PrefetchScalarGridSpec(
                num_scalar_prefetch=1,
                grid=(num_steps,),
                in_specs=[pl.BlockSpec(memory_space=pl.ANY)],   # table stays in HBM
                out_specs=pl.BlockSpec((rows_per_step, S_g),
                                       lambda i, idx_ref: (i, 0)),
                scratch_shapes=[pltpu.SemaphoreType.DMA((n_win,))],
            ),
            compiler_params=compiler_params,
            cost_estimate=cost,
        )(flat_idx, data2d)

    return out2d[:n]


def gather_nd(data, indices, batch_dims: int = 0, *, max_vmem_table_bytes=None):
    """ONNX GatherND with batch_dims=0 (matches onnx2pytorch GatherND.forward).

    Out-of-range indices are wrapped (negatives) then clamped instead of raising.
    """
    if batch_dims != 0:
        raise NotImplementedError(f"GatherND for batch_dims={batch_dims} not implemented.")

    data = jnp.asarray(data)
    indices = jnp.asarray(indices)

    orig_shape = list(indices.shape)
    m = orig_shape[-1]
    n_rank = data.ndim
    if m > n_rank:
        raise ValueError(
            "The last dimension of indices must be <= the rank of data. "
            f"Got indices:{tuple(indices.shape)}, data:{tuple(data.shape)}. {m} > {n_rank}")

    out_shape = tuple(orig_shape[:-1]) + tuple(data.shape[m:])
    num_samples = math.prod(orig_shape[:-1])
    R = math.prod(data.shape[:m])
    S = math.prod(data.shape[m:])

    if num_samples == 0 or R == 0 or S == 0:
        return jnp.zeros(out_shape, dtype=data.dtype)

    # ---- flat row indices: wrap negatives, clamp, dot with row-major strides.
    idx = indices.reshape(num_samples, m).astype(jnp.int32)
    dims = jnp.asarray(data.shape[:m], dtype=jnp.int32)
    idx = jnp.where(idx < 0, idx + dims, idx)
    idx = jnp.clip(idx, 0, dims - 1)                 # never drive an OOB DMA
    strides = jnp.asarray(pl.strides_from_shape(tuple(data.shape[:m])), dtype=jnp.int32)
    flat_idx = jnp.sum(idx * strides, axis=-1).astype(jnp.int32)   # (num_samples,)

    # ---- 2-D table layout; pack sub-32-bit dtypes into uint32 lanes.
    data2d = data.reshape(R, S)
    dt = jnp.dtype(data.dtype)
    itemsize = dt.itemsize
    packable = jnp.issubdtype(dt, jnp.floating) or jnp.issubdtype(dt, jnp.integer)
    pack = 4 // itemsize if (itemsize < 4 and packable) else 1
    if pack > 1 and S % pack == 0:
        data2d = _pack_rows_to_u32(data2d, pack)     # (R, S // pack) uint32
        S_g = S // pack
        row_multiple = _SUBLANE
        packed = True
    else:
        # Unpacked sub-32-bit rows: keep row blocks a multiple of the packed
        # sublane group so tiles stay layout-friendly (may still be slow).
        S_g = S
        row_multiple = _SUBLANE * max(1, 4 // itemsize)
        packed = False

    # ---- chunk over samples so the scalar-prefetch index array stays in SMEM.
    pieces = []
    for start in range(0, num_samples, _MAX_SAMPLES_PER_CALL):
        stop = min(start + _MAX_SAMPLES_PER_CALL, num_samples)
        pieces.append(_gather_rows(data2d, flat_idx[start:stop],
                                   row_multiple, max_vmem_table_bytes))
    out2d = pieces[0] if len(pieces) == 1 else jnp.concatenate(pieces, axis=0)

    if packed:
        out2d = _unpack_rows_from_u32(out2d, pack, data.dtype)       # (n, S)
    # TODO(synk): very large S (a single gathered slice exceeding a VMEM tile)
    # would need a second grid axis tiling S; not implemented here.
    return out2d.reshape(out_shape)


if __name__ == "__main__":
    key = jax.random.PRNGKey(0)
    kd, ki0, ki1 = jax.random.split(key, 3)

    # Case 1: rank-3 data, m=2 -> out = indices.shape[:-1] + data.shape[2:]
    data = jax.random.normal(kd, (4, 8, 32), dtype=jnp.float32)
    indices = jnp.stack(
        [jax.random.randint(ki0, (2, 3), 0, 4, dtype=jnp.int32),
         jax.random.randint(ki1, (2, 3), 0, 8, dtype=jnp.int32)],
        axis=-1,
    )  # (2, 3, 2)
    ref = data[indices[..., 0], indices[..., 1]]
    out_fast = gather_nd(data, indices)                          # VMEM-resident fast path
    out_dma = gather_nd(data, indices, max_vmem_table_bytes=0)   # force HBM DMA-gather path
    jax.block_until_ready((out_fast, out_dma))
    assert out_fast.shape == (2, 3, 32) and out_fast.dtype == data.dtype
    assert jnp.array_equal(out_fast, ref), "VMEM path mismatch vs reference gather"
    assert jnp.array_equal(out_dma, ref), "DMA path mismatch vs reference gather"

    # Case 2: m == data.ndim (gather scalars) -> width-1 output rows.
    data2 = jax.random.normal(jax.random.fold_in(kd, 7), (6, 16), dtype=jnp.float32)
    idx2 = jnp.stack(
        [jax.random.randint(jax.random.fold_in(ki0, 1), (5,), 0, 6, dtype=jnp.int32),
         jax.random.randint(jax.random.fold_in(ki1, 1), (5,), 0, 16, dtype=jnp.int32)],
        axis=-1,
    )  # (5, 2)
    out2 = gather_nd(data2, idx2)
    jax.block_until_ready(out2)
    ref2 = data2[idx2[..., 0], idx2[..., 1]]
    assert out2.shape == (5,) and jnp.array_equal(out2, ref2), "scalar-gather mismatch"

    # Case 3: bf16 data -> exercises the uint32 row-packing path.
    data3 = jax.random.normal(jax.random.fold_in(kd, 11), (5, 7, 6), dtype=jnp.bfloat16)
    idx3 = jax.random.randint(jax.random.fold_in(ki0, 2), (4, 1), 0, 5, dtype=jnp.int32)
    out3 = gather_nd(data3, idx3)
    jax.block_until_ready(out3)
    ref3 = data3[idx3[..., 0]]
    assert out3.shape == (4, 7, 6) and out3.dtype == data3.dtype
    assert jnp.array_equal(out3, ref3), "bf16 packed-gather mismatch"

    print("KERNEL_OK")
</pallas_src>

<mosaic_0001>
module attributes {stable_mosaic.version = 11 : i64} {
  func.func @_vmem_gather_kernel(%arg0: i32, %arg1: memref<8xi32, #tpu.memory_space<smem>>, %arg2: memref<32x32xf32, #tpu.memory_space<vmem>>, %arg3: memref<8x32xf32, #tpu.memory_space<vmem>>) attributes {dimension_semantics = [#tpu.dimension_semantics<parallel>], iteration_bounds = array<i64: 1>, scalar_prefetch = 1 : i64, scratch_operands = 0 : i64, tpu.core_type = #tpu.core_type<tc>, window_params = [{pipeline_mode = #tpu.pipeline_mode<synchronous>, transform_indices = @transform_0, window_bounds = array<i64: 32, 32>}, {transform_indices = @transform_1, window_bounds = array<i64: 8, 32>}]} {
    %c8_i32 = arith.constant 8 : i32
    %0 = arith.muli %arg0, %c8_i32 : i32
    %c0_i32 = arith.constant 0 : i32
    %1 = arith.addi %0, %c0_i32 : i32
    %2 = arith.index_cast %1 : i32 to index
    %3 = memref.load %arg1[%2] : memref<8xi32, #tpu.memory_space<smem>>
    %4 = arith.index_cast %3 : i32 to index
    %c0 = arith.constant 0 : index
    %5 = vector.load %arg2[%4, %c0] : memref<32x32xf32, #tpu.memory_space<vmem>>, vector<1x32xf32>
    %6 = arith.index_cast %c0_i32 : i32 to index
    %c0_0 = arith.constant 0 : index
    %7 = vector.load %arg3[%6, %c0_0] : memref<8x32xf32, #tpu.memory_space<vmem>>, vector<1x32xf32>
    tpu.vector_store %arg3[%6, %c0_0], %5 {strides = array<i32>} : memref<8x32xf32, #tpu.memory_space<vmem>>, vector<1x32xf32>,
    %c1_i32 = arith.constant 1 : i32
    %8 = arith.addi %0, %c1_i32 : i32
    %9 = arith.index_cast %8 : i32 to index
    %10 = memref.load %arg1[%9] : memref<8xi32, #tpu.memory_space<smem>>
    %11 = arith.index_cast %10 : i32 to index
    %c0_1 = arith.constant 0 : index
    %12 = vector.load %arg2[%11, %c0_1] : memref<32x32xf32, #tpu.memory_space<vmem>>, vector<1x32xf32>
    %13 = arith.index_cast %c1_i32 : i32 to index
    %c0_2 = arith.constant 0 : index
    %14 = vector.load %arg3[%13, %c0_2] : memref<8x32xf32, #tpu.memory_space<vmem>>, vector<1x32xf32>
    tpu.vector_store %arg3[%13, %c0_2], %12 {strides = array<i32>} : memref<8x32xf32, #tpu.memory_space<vmem>>, vector<1x32xf32>,
    %c2_i32 = arith.constant 2 : i32
    %15 = arith.addi %0, %c2_i32 : i32
    %16 = arith.index_cast %15 : i32 to index
    %17 = memref.load %arg1[%16] : memref<8xi32, #tpu.memory_space<smem>>
    %18 = arith.index_cast %17 : i32 to index
    %c0_3 = arith.constant 0 : index
    %19 = vector.load %arg2[%18, %c0_3] : memref<32x32xf32, #tpu.memory_space<vmem>>, vector<1x32xf32>
    %20 = arith.index_cast %c2_i32 : i32 to index
    %c0_4 = arith.constant 0 : index
    %21 = vector.load %arg3[%20, %c0_4] : memref<8x32xf32, #tpu.memory_space<vmem>>, vector<1x32xf32>
    tpu.vector_store %arg3[%20, %c0_4], %19 {strides = array<i32>} : memref<8x32xf32, #tpu.memory_space<vmem>>, vector<1x32xf32>,
    %c3_i32 = arith.constant 3 : i32
    %22 = arith.addi %0, %c3_i32 : i32
    %23 = arith.index_cast %22 : i32 to index
    %24 = memref.load %arg1[%23] : memref<8xi32, #tpu.memory_space<smem>>
    %25 = arith.index_cast %24 : i32 to index
    %c0_5 = arith.constant 0 : index
    %26 = vector.load %arg2[%25, %c0_5] : memref<32x32xf32, #tpu.memory_space<vmem>>, vector<1x32xf32>
    %27 = arith.index_cast %c3_i32 : i32 to index
    %c0_6 = arith.constant 0 : index
    %28 = vector.load %arg3[%27, %c0_6] : memref<8x32xf32, #tpu.memory_space<vmem>>, vector<1x32xf32>
    tpu.vector_store %arg3[%27, %c0_6], %26 {strides = array<i32>} : memref<8x32xf32, #tpu.memory_space<vmem>>, vector<1x32xf32>,
    %c4_i32 = arith.constant 4 : i32
    %29 = arith.addi %0, %c4_i32 : i32
    %30 = arith.index_cast %29 : i32 to index
    %31 = memref.load %arg1[%30] : memref<8xi32, #tpu.memory_space<smem>>
    %32 = arith.index_cast %31 : i32 to index
    %c0_7 = arith.constant 0 : index
    %33 = vector.load %arg2[%32, %c0_7] : memref<32x32xf32, #tpu.memory_space<vmem>>, vector<1x32xf32>
    %34 = arith.index_cast %c4_i32 : i32 to index
    %c0_8 = arith.constant 0 : index
    %35 = vector.load %arg3[%34, %c0_8] : memref<8x32xf32, #tpu.memory_space<vmem>>, vector<1x32xf32>
    tpu.vector_store %arg3[%34, %c0_8], %33 {strides = array<i32>} : memref<8x32xf32, #tpu.memory_space<vmem>>, vector<1x32xf32>,
    %c5_i32 = arith.constant 5 : i32
    %36 = arith.addi %0, %c5_i32 : i32
    %37 = arith.index_cast %36 : i32 to index
    %38 = memref.load %arg1[%37] : memref<8xi32, #tpu.memory_space<smem>>
    %39 = arith.index_cast %38 : i32 to index
    %c0_9 = arith.constant 0 : index
    %40 = vector.load %arg2[%39, %c0_9] : memref<32x32xf32, #tpu.memory_space<vmem>>, vector<1x32xf32>
    %41 = arith.index_cast %c5_i32 : i32 to index
    %c0_10 = arith.constant 0 : index
    %42 = vector.load %arg3[%41, %c0_10] : memref<8x32xf32, #tpu.memory_space<vmem>>, vector<1x32xf32>
    tpu.vector_store %arg3[%41, %c0_10], %40 {strides = array<i32>} : memref<8x32xf32, #tpu.memory_space<vmem>>, vector<1x32xf32>,
    %c6_i32 = arith.constant 6 : i32
    %43 = arith.addi %0, %c6_i32 : i32
    %44 = arith.index_cast %43 : i32 to index
    %45 = memref.load %arg1[%44] : memref<8xi32, #tpu.memory_space<smem>>
    %46 = arith.index_cast %45 : i32 to index
    %c0_11 = arith.constant 0 : index
    %47 = vector.load %arg2[%46, %c0_11] : memref<32x32xf32, #tpu.memory_space<vmem>>, vector<1x32xf32>
    %48 = arith.index_cast %c6_i32 : i32 to index
    %c0_12 = arith.constant 0 : index
    %49 = vector.load %arg3[%48, %c0_12] : memref<8x32xf32, #tpu.memory_space<vmem>>, vector<1x32xf32>
    tpu.vector_store %arg3[%48, %c0_12], %47 {strides = array<i32>} : memref<8x32xf32, #tpu.memory_space<vmem>>, vector<1x32xf32>,
    %c7_i32 = arith.constant 7 : i32
    %50 = arith.addi %0, %c7_i32 : i32
    %51 = arith.index_cast %50 : i32 to index
    %52 = memref.load %arg1[%51] : memref<8xi32, #tpu.memory_space<smem>>
    %53 = arith.index_cast %52 : i32 to index
    %c0_13 = arith.constant 0 : index
    %54 = vector.load %arg2[%53, %c0_13] : memref<32x32xf32, #tpu.memory_space<vmem>>, vector<1x32xf32>
    %55 = arith.index_cast %c7_i32 : i32 to index
    %c0_14 = arith.constant 0 : index
    %56 = vector.load %arg3[%55, %c0_14] : memref<8x32xf32, #tpu.memory_space<vmem>>, vector<1x32xf32>
    tpu.vector_store %arg3[%55, %c0_14], %54 {strides = array<i32>} : memref<8x32xf32, #tpu.memory_space<vmem>>, vector<1x32xf32>,
    %c8_i32_15 = arith.constant 8 : i32
    return
  }
  func.func @transform_0(%arg0: i32, %arg1: memref<8xi32, #tpu.memory_space<smem>>) -> (i32, i32) {
    %c0_i32 = arith.constant 0 : i32
    %c0_i32_0 = arith.constant 0 : i32
    %c0_i32_1 = arith.constant 0 : i32
    return %c0_i32, %c0_i32_0 : i32, i32
  }
  func.func @transform_1(%arg0: i32, %arg1: memref<8xi32, #tpu.memory_space<smem>>) -> (i32, i32) {
    %c0_i32 = arith.constant 0 : i32
    %c0_i32_0 = arith.constant 0 : i32
    return %arg0, %c0_i32 : i32, i32
  }
}

</mosaic_0001>

<llo_original>
// kernel: tpu_custom_call.1
$region0: #{tpu_custom_call.1}
  #allocation0 [shape = 'u32[]', space=smem, size = 0x4, offset = 0x4, fixed_abs, tag = 'smem constant byte address 0x4 - core index']
  #allocation1 [shape = 'u32[144,128]{1,0:T(1,128)}', space=vmem, size = 0x12000, scoped, tag = 'internal scratch']
  #allocation2 [shape = 's32[1]{0}', space=sflag, size = 0x4, scoped, tag = 'scoped memory for tpu_custom_call.1']
  #allocation3 [shape = 'u8[512]{0}', space=smem, size = 0x200, scoped, tag = 'prefetched SMEM operand 0']
  %s0 = inlined_call_operand.hbm [shape: s32[8], index: 0, kind: input, shape index: {}]
  %s1 = inlined_call_operand.hbm [shape: f32[32,32], index: 1, kind: input, shape index: {}]
  %s2 = inlined_call_operand.hbm [shape: f32[8,32], index: 2, kind: output, shape index: {}]
  %s3 = sld [smem:[#allocation0]]
  $region18: #{tpu_custom_call.1} parent=0
    _
  %s5 = ssub.s32 1, %s3
  %s6 = scalar_select 0, %s5, %s3
  %8 = dma.hbm_to_smem %s0, 16, [#allocation3], [#allocation2]
  %9 = dma.done [#allocation2], 16
  %10 = sfence
  $region1: #{tpu_custom_call.1} parent=0
    #allocation4 [shape = 'u8[16384]{0}', space=vmem, size = 0x4000, scoped, tag = 'input window, operand 1, single buffered']
    #allocation5 [shape = 's32[1]{0}', space=sflag, size = 0x4, scoped, tag = 'scoped memory for tpu_custom_call.1']
    #allocation6 [shape = 's32[1]{0}', space=sflag, size = 0x4, scoped, tag = 'scoped memory for tpu_custom_call.1']
    #allocation7 [shape = 'u8[4096]{0}', space=vmem, size = 0x1000, scoped, tag = 'output window, operand 0, single buffered']
    %11 = vsyncpa [#allocation5], 0
    %12 = vsyncpa [#allocation6], 0
    // Predicated region
    $region2: #{tpu_custom_call.1} parent=1 // pred_check
      _
    $region3: #{tpu_custom_call.1} parent=1 // pred_check_branch
      %14 = sbr.rel (0) target = $region5
    $region4: #{tpu_custom_call.1} parent=1 // pred_region
      %s16 = ssub.s32 512, 512
      %17 = vsyncadd [#allocation5], %s16
      %s18 = sshll.u32 [#allocation4], 4
      %s19 = int_to_ptr.vmem [resolvable:$true] %s18
      %24 = dma.hbm_to_vmem [thread:$0]  %s1, 512, %s19, [#allocation5], 128, 128, 8
    $region5: #{tpu_custom_call.1} parent=1 // pred_fallthru
      _
    // Predicated region
    $region6: #{tpu_custom_call.1} parent=1 // pred_check
      _
    $region7: #{tpu_custom_call.1} parent=1 // pred_check_branch
      %26 = sbr.rel (0) target = $region9
    $region8: #{tpu_custom_call.1} parent=1 // pred_region
      %27 = dma.done [#allocation5], 512
    $region9: #{tpu_custom_call.1} parent=1 // pred_fallthru
      _
    %s28 = smul.u32 0, 8
    %s29 = sld [smem:[#allocation3 + %s28]]
    %s30 = scalar_lea.vmem [#allocation4], %s29
    %v31 = vld [vmem:[%s30] sm:$0x1]
    %vm32 = vcmask 253952
    %33 = vst.msk [vmem:[#allocation7] sm:$0x1] %vm32, %v31
    %s34 = sadd.s32 %s28, 1
    %s35 = sld [smem:[#allocation3 + %s34]]
    %s36 = scalar_lea.vmem [#allocation4], %s35
    %v37 = vld [vmem:[%s36] sm:$0x1]
    %38 = vst.msk [vmem:[#allocation7 + $0x1] sm:$0x1] %vm32, %v37
    %s39 = sadd.s32 %s28, 2
    %s40 = sld [smem:[#allocation3 + %s39]]
    %s41 = scalar_lea.vmem [#allocation4], %s40
    %v42 = vld [vmem:[%s41] sm:$0x1]
    %43 = vst.msk [vmem:[#allocation7 + $0x2] sm:$0x1] %vm32, %v42
    %s44 = sadd.s32 %s28, 3
    %s45 = sld [smem:[#allocation3 + %s44]]
    %s46 = scalar_lea.vmem [#allocation4], %s45
    %v47 = vld [vmem:[%s46] sm:$0x1]
    %48 = vst.msk [vmem:[#allocation7 + $0x3] sm:$0x1] %vm32, %v47
    %s49 = sadd.s32 %s28, 4
    %s50 = sld [smem:[#allocation3 + %s49]]
    %s51 = scalar_lea.vmem [#allocation4], %s50
    %v52 = vld [vmem:[%s51] sm:$0x1]
    %53 = vst.msk [vmem:[#allocation7 + $0x4] sm:$0x1] %vm32, %v52
    %s54 = sadd.s32 %s28, 5
    %s55 = sld [smem:[#allocation3 + %s54]]
    %s56 = scalar_lea.vmem [#allocation4], %s55
    %v57 = vld [vmem:[%s56] sm:$0x1]
    %58 = vst.msk [vmem:[#allocation7 + $0x5] sm:$0x1] %vm32, %v57
    %s59 = sadd.s32 %s28, 6
    %s60 = sld [smem:[#allocation3 + %s59]]
    %s61 = scalar_lea.vmem [#allocation4], %s60
    %v62 = vld [vmem:[%s61] sm:$0x1]
    %63 = vst.msk [vmem:[#allocation7 + $0x6] sm:$0x1] %vm32, %v62
    %s64 = sadd.s32 %s28, 7
    %s65 = sld [smem:[#allocation3 + %s64]]
    %s66 = scalar_lea.vmem [#allocation4], %s65
    %v67 = vld [vmem:[%s66] sm:$0x1]
    %68 = vst.msk [vmem:[#allocation7 + $0x7] sm:$0x1] %vm32, %v67
    // Predicated region
    $region10: #{tpu_custom_call.1} parent=1 // pred_check
      _
    $region11: #{tpu_custom_call.1} parent=1 // pred_check_branch
      %70 = sbr.rel (0) target = $region13
    $region12: #{tpu_custom_call.1} parent=1 // pred_region
      %s72 = ssub.s32 128, 128
      %73 = vsyncadd [#allocation6], %s72
      %s75 = sshll.u32 [#allocation7], 4
      %s76 = int_to_ptr.vmem [resolvable:$true] %s75
      %78 = dma.vmem_to_hbm [thread:$0]  %s76, 128, %s2, [#allocation6]
    $region13: #{tpu_custom_call.1} parent=1 // pred_fallthru
      _
    // Predicated region
    $region14: #{tpu_custom_call.1} parent=1 // pred_check
      _
    $region15: #{tpu_custom_call.1} parent=1 // pred_check_branch
      %80 = sbr.rel (0) target = $region17
    $region16: #{tpu_custom_call.1} parent=1 // pred_region
      %81 = dma.done [#allocation6], 128
    $region17: #{tpu_custom_call.1} parent=1 // pred_fallthru
      _
    %82 = vsyncpa [#allocation5], 1
    %83 = vsyncpa [#allocation6], 1

</llo_original>
